<compile_context>
chip_gen: v7x
topology: tpu7x:2x2x1
jax: 0.10.0
libtpu: 0.0.40
codegen_flags: <defaults>
</compile_context>

<pallas_src>
import jax
import jax.numpy as jnp
from jax.experimental import pallas as pl
from jax.experimental.pallas import tpu as pltpu


def _round_up(x, m):
    return ((x + m - 1) // m) * m


def _b2d(r, c, itemsize=4):
    """Rough VMEM bytes of an (r, c) block (sublane/lane padded)."""
    return _round_up(max(r, 1), 8) * _round_up(max(c, 1), 128) * itemsize


# --------------------------- prologue kernels -------------------------------

def _adj_prep_cast_kernel(adj_ref, adj_out_ref, rowsum_ref):
    # Read the f32 adjacency row-tile once: emit the narrow streaming copy and
    # the per-row degree sums in the same pass.
    a = adj_ref[...]
    adj_out_ref[...] = a.astype(adj_out_ref.dtype)
    rowsum_ref[...] = jnp.sum(a, axis=1, keepdims=True)


def _adj_rowsum_kernel(adj_ref, rowsum_ref):
    rowsum_ref[...] = jnp.sum(adj_ref[...], axis=1, keepdims=True)


# ----------------------------- layer kernels --------------------------------
# Pass 1 (two variants):  zs = d * ( relu( prop [@ W1] + b1 ) @ W2 )
# with prop_tile = d_tile * (adj_tile @ p1) + (lmb*d)_tile * p1_tile
# where p1 = d*feat (W1 applied after propagation) or p1 = d*(feat@W1).

def _gcn_pass1_w1_kernel(adj_ref, p1_ref, d_ref, ld_ref, w1_ref, b1_ref, w2_ref, zs_ref):
    tm = adj_ref.shape[0]
    start = pl.multiple_of(pl.program_id(0) * tm, tm)
    prop = (d_ref[...] * jnp.dot(adj_ref[...].astype(jnp.float32), p1_ref[...],
                                 preferred_element_type=jnp.float32)
            + ld_ref[...] * p1_ref[pl.ds(start, tm), :])
    h1 = jnp.maximum(
        jnp.dot(prop, w1_ref[...], preferred_element_type=jnp.float32) + b1_ref[...], 0.0)
    zs_ref[...] = d_ref[...] * jnp.dot(h1, w2_ref[...], preferred_element_type=jnp.float32)


def _gcn_pass1_now1_kernel(adj_ref, p1_ref, d_ref, ld_ref, b1_ref, w2_ref, zs_ref):
    tm = adj_ref.shape[0]
    start = pl.multiple_of(pl.program_id(0) * tm, tm)
    prop = (d_ref[...] * jnp.dot(adj_ref[...].astype(jnp.float32), p1_ref[...],
                                 preferred_element_type=jnp.float32)
            + ld_ref[...] * p1_ref[pl.ds(start, tm), :])
    h1 = jnp.maximum(prop + b1_ref[...], 0.0)
    zs_ref[...] = d_ref[...] * jnp.dot(h1, w2_ref[...], preferred_element_type=jnp.float32)


# Pass 2:  out = relu( d_tile * (adj_tile @ zs) + (lmb*d)_tile * zs_tile + b2 )

def _gcn_pass2_kernel(adj_ref, zs_ref, d_ref, ld_ref, b2_ref, out_ref):
    tm = adj_ref.shape[0]
    start = pl.multiple_of(pl.program_id(0) * tm, tm)
    prop = (d_ref[...] * jnp.dot(adj_ref[...].astype(jnp.float32), zs_ref[...],
                                 preferred_element_type=jnp.float32)
            + ld_ref[...] * zs_ref[pl.ds(start, tm), :])
    out_ref[...] = jnp.maximum(prop + b2_ref[...], 0.0)


# -------------------------------- wrapper ------------------------------------

def gcn_forward(adj, feat, lmb, w1, b1, w2, b2, *, row_tile=None,
                adj_dtype=jnp.bfloat16):
    """adj: (N, N), feat: (N, F), lmb: scalar.
    w1: (F, H) pre-transposed gc1 weight, b1: (1, H),
    w2: (H, O) pre-transposed gc2 weight, b2: (1, O). Returns (N, O) f32."""
    n = adj.shape[0]
    f_dim = feat.shape[1]
    h_dim = w1.shape[1]
    o_dim = w2.shape[1]

    adj = adj.astype(jnp.float32)
    feat = feat.astype(jnp.float32)
    w1 = w1.astype(jnp.float32)
    b1 = b1.astype(jnp.float32)
    w2 = w2.astype(jnp.float32)
    b2 = b2.astype(jnp.float32)
    lmb = jnp.asarray(lmb, jnp.float32)

    use_cast = jnp.dtype(adj_dtype) != jnp.dtype(jnp.float32)
    adj_itemsize = jnp.dtype(adj_dtype).itemsize

    o_pad = _round_up(o_dim, 128)
    # Layer-1 propagation operand: pick the narrower of F and H.
    apply_w1 = h_dim >= f_dim
    w_prop = f_dim if apply_w1 else h_dim

    # ---- VMEM-capacity-aware tile sizing ------------------------------------
    try:
        vmem_cap = int(pltpu.get_tpu_info().vmem_capacity_bytes)
    except Exception:
        vmem_cap = 128 << 20
    usable = max(32 << 20, vmem_cap - (16 << 20))   # leave Mosaic scratch headroom

    n_est = _round_up(max(n, 16), 16)
    if row_tile is None:
        # Residents are single-buffered (pl.Buffered(1)).
        res_est = (_b2d(n_est, w_prop) + _b2d(n_est, o_pad)
                   + _b2d(f_dim, h_dim) + _b2d(1, h_dim)
                   + _b2d(h_dim, o_pad) + _b2d(1, o_pad))
        per_row_pass = (_round_up(n_est, 128) * adj_itemsize      # adj row tile
                        + 2 * 128 * 4                              # d, ld tiles
                        + _round_up(o_pad, 128) * 4)               # output tile
        per_row_prep = _round_up(n_est, 128) * (4 + (adj_itemsize if use_cast else 0)) \
            + 128 * 4
        budget_pass = usable - res_est - (4 << 20)
        budget_prep = usable - (4 << 20)
        rt = min(budget_pass // (2 * per_row_pass),
                 budget_prep // (2 * per_row_prep))
        row_tile = int(max(16, min(1024, (rt // 16) * 16)))
    row_tile = max(16, (int(row_tile) // 16) * 16)
    row_tile = min(row_tile, n_est)
    n_pad = _round_up(n_est, row_tile)

    # ---- padding (padded rows are masked via d = 0, sliced off at the end) --
    if n_pad != n:
        pad = n_pad - n
        adj_p = jnp.pad(adj, ((0, pad), (0, pad)))
        feat_p = jnp.pad(feat, ((0, pad), (0, 0)))
    else:
        adj_p, feat_p = adj, feat

    w2_p = jnp.pad(w2, ((0, 0), (0, o_pad - o_dim)))
    b2_p = jnp.pad(b2, ((0, 0), (0, o_pad - o_dim)))

    grid = (n_pad // row_tile,)

    def row_spec(c):
        return pl.BlockSpec((row_tile, c), lambda i: (i, 0))

    def resident_spec(r, c):
        # Constant index_map -> block never changes; single-buffer it.
        return pl.BlockSpec((r, c), lambda i: (0, 0), pipeline_mode=pl.Buffered(1))

    # ---- scoped-VMEM limit (capacity aware) ----------------------------------
    resident_bytes = (_b2d(n_pad, w_prop) + _b2d(n_pad, o_pad)
                      + _b2d(f_dim, h_dim) + _b2d(1, h_dim)
                      + _b2d(h_dim, o_pad) + _b2d(1, o_pad))
    stream_bytes = 2 * (_b2d(row_tile, n_pad, adj_itemsize)
                        + 2 * _b2d(row_tile, 1) + _b2d(row_tile, o_pad))
    prep_bytes = 2 * (_b2d(row_tile, n_pad, 4)
                      + (_b2d(row_tile, n_pad, adj_itemsize) if use_cast else 0)
                      + _b2d(row_tile, 1))
    est = max(resident_bytes + stream_bytes, prep_bytes)
    vmem_limit = int(min(usable, max(32 << 20, est + (8 << 20))))
    cparams = pltpu.CompilerParams(
        # "parallel" shards row tiles across TCs where supported (v7x megacore).
        dimension_semantics=("parallel",),
        vmem_limit_bytes=vmem_limit,
    )

    # ---- prologue: one f32 read of adj -> (bf16 copy, rowsum) ----------------
    if use_cast:
        adj_s, rowsum = pl.pallas_call(
            _adj_prep_cast_kernel,
            out_shape=(jax.ShapeDtypeStruct((n_pad, n_pad), adj_dtype),
                       jax.ShapeDtypeStruct((n_pad, 1), jnp.float32)),
            grid=grid,
            in_specs=[row_spec(n_pad)],
            out_specs=(row_spec(n_pad), row_spec(1)),
            compiler_params=cparams,
        )(adj_p)
    else:
        rowsum = pl.pallas_call(
            _adj_rowsum_kernel,
            out_shape=jax.ShapeDtypeStruct((n_pad, 1), jnp.float32),
            grid=grid,
            in_specs=[row_spec(n_pad)],
            out_specs=row_spec(1),
            compiler_params=cparams,
        )(adj_p)
        adj_s = adj_p

    # ---- fold lmb*I and D^{-1/2} into tiny per-row vectors (no A / A_hat) ----
    deg = rowsum + lmb                                   # rowsum(adj + lmb*I), (n_pad, 1)
    row_valid = (jnp.arange(n_pad) < n)[:, None]
    d = jnp.where(row_valid, jax.lax.rsqrt(deg), 0.0)    # diag(D)^{-1/2}, 0 on padded rows
    ld = lmb * d                                         # folds the lmb*I self-loop term

    if apply_w1:
        p1 = d * feat_p                                  # (n_pad, F)
    else:
        p1 = d * (feat_p @ w1)                           # reassociated: A_hat @ (feat W1)

    # ---- pass 1 ---------------------------------------------------------------
    in_specs1 = [row_spec(n_pad),                 # adj row tile (bf16 stream)
                 resident_spec(n_pad, w_prop),    # p1 (resident, single-buffered)
                 row_spec(1),                     # d row tile
                 row_spec(1)]                     # ld = lmb*d row tile
    args1 = [adj_s, p1, d, ld]
    if apply_w1:
        in_specs1.append(resident_spec(f_dim, h_dim))
        args1.append(w1)
        kern1 = _gcn_pass1_w1_kernel
    else:
        kern1 = _gcn_pass1_now1_kernel
    in_specs1 += [resident_spec(1, h_dim), resident_spec(h_dim, o_pad)]
    args1 += [b1, w2_p]

    zs = pl.pallas_call(
        kern1,
        out_shape=jax.ShapeDtypeStruct((n_pad, o_pad), jnp.float32),
        grid=grid,
        in_specs=in_specs1,
        out_specs=row_spec(o_pad),
        compiler_params=cparams,
    )(*args1)

    # ---- pass 2: out = relu( A_hat @ (h1 @ W2) + b2 ) -------------------------
    out = pl.pallas_call(
        _gcn_pass2_kernel,
        out_shape=jax.ShapeDtypeStruct((n_pad, o_pad), jnp.float32),
        grid=grid,
        in_specs=[row_spec(n_pad),                 # adj row tile (bf16 stream)
                  resident_spec(n_pad, o_pad),     # zs (resident, single-buffered)
                  row_spec(1), row_spec(1),        # d, ld
                  resident_spec(1, o_pad)],        # b2 (lane-padded)
        out_specs=row_spec(o_pad),
        compiler_params=cparams,
    )(adj_s, zs, d, ld, b2_p)

    return out[:n, :o_dim]


# ------------------------------ reference ------------------------------------

def gcn_reference(adj, feat, lmb, w1, b1, w2, b2):
    n = adj.shape[0]
    a = adj + jnp.eye(n, dtype=jnp.float32) * lmb
    d_inv_sqrt = 1.0 / jnp.sqrt(jnp.sum(a, axis=1))
    a_hat = d_inv_sqrt[:, None] * a * d_inv_sqrt[None, :]
    x = jnp.maximum(a_hat @ feat @ w1 + b1, 0.0)
    x = jnp.maximum(a_hat @ x @ w2 + b2, 0.0)
    return x


if __name__ == "__main__":
    def _make_case(key, node_num, graph_feature_num, gcn_hidden_size, out_feature_num):
        k_adj, k_feat, k_w1, k_b1, k_w2, k_b2 = jax.random.split(key, 6)
        # Binary adjacency (typical GCN input); exactly representable in bf16.
        adj = (jax.random.uniform(k_adj, (node_num, node_num), jnp.float32) < 0.4
               ).astype(jnp.float32)
        feat = jax.random.normal(k_feat, (node_num, graph_feature_num), jnp.float32)
        # PyTorch-Linear-style init, stored pre-transposed as (in, out).
        b1r = 1.0 / (graph_feature_num ** 0.5)
        w1 = jax.random.uniform(k_w1, (graph_feature_num, gcn_hidden_size),
                                jnp.float32, -b1r, b1r)
        b1 = jax.random.uniform(k_b1, (1, gcn_hidden_size), jnp.float32, -b1r, b1r)
        b2r = 1.0 / (gcn_hidden_size ** 0.5)
        w2 = jax.random.uniform(k_w2, (gcn_hidden_size, out_feature_num),
                                jnp.float32, -b2r, b2r)
        b2 = jax.random.uniform(k_b2, (1, out_feature_num), jnp.float32, -b2r, b2r)
        return adj, feat, w1, b1, w2, b2

    key = jax.random.PRNGKey(0)
    k1, k2 = jax.random.split(key)
    lmb = 1.0

    # Case 1: H > F (W1 applied after propagation), N multiple of 16.
    adj, feat, w1, b1, w2, b2 = _make_case(k1, node_num=16, graph_feature_num=8,
                                           gcn_hidden_size=32, out_feature_num=1)
    out = jax.block_until_ready(gcn_forward(adj, feat, lmb, w1, b1, w2, b2))
    ref = gcn_reference(adj, feat, lmb, w1, b1, w2, b2)
    assert out.shape == (16, 1)
    assert jnp.allclose(out, ref, atol=1e-4, rtol=1e-4), float(jnp.max(jnp.abs(out - ref)))

    # Same case with the f32-adjacency path (rowsum-only prologue).
    out32 = jax.block_until_ready(
        gcn_forward(adj, feat, lmb, w1, b1, w2, b2, adj_dtype=jnp.float32))
    assert jnp.allclose(out32, ref, atol=1e-4, rtol=1e-4)

    # Case 2: H < F (reassociated layer 1), N not a multiple of the tile (padding).
    adj2, feat2, w1b, b1b, w2b, b2b = _make_case(k2, node_num=24, graph_feature_num=48,
                                                 gcn_hidden_size=16, out_feature_num=3)
    out2 = jax.block_until_ready(gcn_forward(adj2, feat2, lmb, w1b, b1b, w2b, b2b))
    ref2 = gcn_reference(adj2, feat2, lmb, w1b, b1b, w2b, b2b)
    assert out2.shape == (24, 3)
    assert jnp.allclose(out2, ref2, atol=1e-4, rtol=1e-4), \
        float(jnp.max(jnp.abs(out2 - ref2)))

    print("KERNEL_OK")
</pallas_src>

<mosaic_0001>
module attributes {stable_mosaic.version = 11 : i64} {
  func.func @_adj_prep_cast_kernel(%arg0: i32, %arg1: memref<16x16xf32, #tpu.memory_space<vmem>>, %arg2: memref<16x16xbf16, #tpu.memory_space<vmem>>, %arg3: memref<16x1xf32, #tpu.memory_space<vmem>>) attributes {dimension_semantics = [#tpu.dimension_semantics<parallel>], iteration_bounds = array<i64: 1>, scalar_prefetch = 0 : i64, scratch_operands = 0 : i64, tpu.core_type = #tpu.core_type<tc>, window_params = [{transform_indices = @transform_0, window_bounds = array<i64: 16, 16>}, {transform_indices = @transform_1, window_bounds = array<i64: 16, 16>}, {transform_indices = @transform_2, window_bounds = array<i64: 16, 1>}]} {
    %c0 = arith.constant 0 : index
    %c0_0 = arith.constant 0 : index
    %0 = vector.load %arg1[%c0, %c0_0] : memref<16x16xf32, #tpu.memory_space<vmem>>, vector<16x16xf32>
    %1 = arith.truncf %0 : vector<16x16xf32> to vector<16x16xbf16>
    %c0_1 = arith.constant 0 : index
    %c0_2 = arith.constant 0 : index
    %2 = vector.load %arg2[%c0_1, %c0_2] : memref<16x16xbf16, #tpu.memory_space<vmem>>, vector<16x16xbf16>
    tpu.vector_store %arg2[%c0_1, %c0_2], %1 {strides = array<i32>} : memref<16x16xbf16, #tpu.memory_space<vmem>>, vector<16x16xbf16>,
    %cst = arith.constant dense<0.000000e+00> : vector<16xf32>
    %3 = vector.multi_reduction <add>, %0, %cst [1] : vector<16x16xf32> to vector<16xf32>
    %4 = vector.shape_cast %3 : vector<16xf32> to vector<16x1xf32>
    %c0_3 = arith.constant 0 : index
    %c0_4 = arith.constant 0 : index
    %5 = vector.load %arg3[%c0_3, %c0_4] : memref<16x1xf32, #tpu.memory_space<vmem>>, vector<16x1xf32>
    tpu.vector_store %arg3[%c0_3, %c0_4], %4 {strides = array<i32>} : memref<16x1xf32, #tpu.memory_space<vmem>>, vector<16x1xf32>,
    return
  }
  func.func @transform_0(%arg0: i32) -> (i32, i32) {
    %c0_i32 = arith.constant 0 : i32
    %c0_i32_0 = arith.constant 0 : i32
    return %arg0, %c0_i32 : i32, i32
  }
  func.func @transform_1(%arg0: i32) -> (i32, i32) {
    %c0_i32 = arith.constant 0 : i32
    %c0_i32_0 = arith.constant 0 : i32
    return %arg0, %c0_i32 : i32, i32
  }
  func.func @transform_2(%arg0: i32) -> (i32, i32) {
    %c0_i32 = arith.constant 0 : i32
    %c0_i32_0 = arith.constant 0 : i32
    return %arg0, %c0_i32 : i32, i32
  }
}

</mosaic_0001>

<llo_original>
// kernel: tpu_custom_call.1
$region0: #{tpu_custom_call.1}
  #allocation0 [shape = 'u32[]', space=smem, size = 0x4, offset = 0x4, fixed_abs, tag = 'smem constant byte address 0x4 - core index']
  #allocation1 [shape = 'u32[144,128]{1,0:T(1,128)}', space=vmem, size = 0x12000, scoped, tag = 'internal scratch']
  %s0 = inlined_call_operand.hbm [shape: f32[16,16], index: 0, kind: input, shape index: {}]
  %s1 = inlined_call_operand.hbm [shape: bf16[16,16], index: 1, kind: output, shape index: {0}]
  %s2 = inlined_call_operand.vmem [shape: f32[16,1], index: 2, kind: output, shape index: {1}]
  %3 = xla_tuple %s1, %s2
  %s4 = sld [smem:[#allocation0]]
  $region26: #{tpu_custom_call.1} parent=0
    _
  %s6 = ssub.s32 1, %s4
  %s7 = scalar_select 0, %s6, %s4
  $region1: #{tpu_custom_call.1} parent=0
    #allocation2 [shape = 'u8[8192]{0}', space=vmem, size = 0x2000, scoped, tag = 'input window, operand 0, single buffered']
    #allocation3 [shape = 's32[1]{0}', space=sflag, size = 0x4, scoped, tag = 'scoped memory for tpu_custom_call.1']
    #allocation4 [shape = 's32[1]{0}', space=sflag, size = 0x4, scoped, tag = 'scoped memory for tpu_custom_call.1']
    #allocation5 [shape = 'u8[4096]{0}', space=vmem, size = 0x1000, scoped, tag = 'output window, operand 0, single buffered']
    %8 = vsyncpa [#allocation3], 0
    %9 = vsyncpa [#allocation4], 0
    // Predicated region
    $region2: #{tpu_custom_call.1} parent=1 // pred_check
      _
    $region3: #{tpu_custom_call.1} parent=1 // pred_check_branch
      %11 = sbr.rel (0) target = $region5
    $region4: #{tpu_custom_call.1} parent=1 // pred_region
      %s13 = ssub.s32 256, 256
      %14 = vsyncadd [#allocation3], %s13
      %s15 = sshll.u32 [#allocation2], 4
      %s16 = int_to_ptr.vmem [resolvable:$true] %s15
      %21 = dma.hbm_to_vmem [thread:$0]  %s0, 256, %s16, [#allocation3], 128, 128, 8
    $region5: #{tpu_custom_call.1} parent=1 // pred_fallthru
      _
    // Predicated region
    $region6: #{tpu_custom_call.1} parent=1 // pred_check
      _
    $region7: #{tpu_custom_call.1} parent=1 // pred_check_branch
      %23 = sbr.rel (0) target = $region9
    $region8: #{tpu_custom_call.1} parent=1 // pred_region
      %24 = dma.done [#allocation3], 256
    $region9: #{tpu_custom_call.1} parent=1 // pred_fallthru
      _
    %v25 = vld [vmem:[#allocation2] sm:$0xff]
    %v26 = vld [vmem:[#allocation2 + $0x8] sm:$0xff]
    %v27 = vpack.c.bf16 %v26, %v25
    %v29 = vunpack.c.l.b16 %v27
    %v30 = vunpack.c.h.b16 %v27
    %v31 = vpack.c.b16 %v29, %v29
    %v32 = vpack.c.b16 %v30, %v30
    %vm35 = vcmask 125952
    %36 = vst.msk [vmem:[#allocation5] sm:$0xf] %vm35, %v31
    %37 = vst.msk [vmem:[#allocation5 + $0x4] sm:$0xf] %vm35, %v32
    %vm38 = vcmask 130048
    %v39 = vsel %vm38, %v25, 0.0
    %40 = vadd.xlane.f32.xlu0 %v39
    %v41 = vpop.xlane.xlu0 %40
    %v42 = vsel %vm38, %v26, 0.0
    %43 = vadd.xlane.f32.xlu0 %v42
    %v44 = vpop.xlane.xlu0 %43
    %vm45 = vcmask 7168
    %46 = vst.msk [vmem:[%s2] sm:$0xff] %vm45, %v41
    %47 = vst.msk [vmem:[%s2 + $0x8] sm:$0xff] %vm45, %v44
    // Predicated region
    $region10: #{tpu_custom_call.1} parent=1 // pred_check
      _
    $region11: #{tpu_custom_call.1} parent=1 // pred_check_branch
      %49 = sbr.rel (0) target = $region13
    $region12: #{tpu_custom_call.1} parent=1 // pred_region
      %s51 = ssub.s32 128, 128
      %52 = vsyncadd [#allocation4], %s51
      %s53 = sshll.u32 [#allocation5], 4
      %s54 = int_to_ptr.vmem [resolvable:$true] %s53
      %59 = dma.vmem_to_hbm [thread:$0]  %s54, 128, %s1, [#allocation4], 64, 64, 4
    $region13: #{tpu_custom_call.1} parent=1 // pred_fallthru
      _
    // Predicated region
    $region14: #{tpu_custom_call.1} parent=1 // pred_check
      _
    $region15: #{tpu_custom_call.1} parent=1 // pred_check_branch
      %61 = sbr.rel (0) target = $region17
    $region16: #{tpu_custom_call.1} parent=1 // pred_region
      _
    $region17: #{tpu_custom_call.1} parent=1 // pred_fallthru
      _
    // Predicated region
    $region18: #{tpu_custom_call.1} parent=1 // pred_check
      _
    $region19: #{tpu_custom_call.1} parent=1 // pred_check_branch
      %63 = sbr.rel (0) target = $region21
    $region20: #{tpu_custom_call.1} parent=1 // pred_region
      %64 = dma.done [#allocation4], 128
    $region21: #{tpu_custom_call.1} parent=1 // pred_fallthru
      _
    // Predicated region
    $region22: #{tpu_custom_call.1} parent=1 // pred_check
      _
    $region23: #{tpu_custom_call.1} parent=1 // pred_check_branch
      %66 = sbr.rel (0) target = $region25
    $region24: #{tpu_custom_call.1} parent=1 // pred_region
      _
    $region25: #{tpu_custom_call.1} parent=1 // pred_fallthru
      _
    %67 = vsyncpa [#allocation3], 1
    %68 = vsyncpa [#allocation4], 1

</llo_original>
